<compile_context>
chip_gen: v6e
topology: v6e:2x2x1
jax: 0.10.0
libtpu: 0.0.40
codegen_flags: <defaults>
</compile_context>

<pallas_src>
import functools
import math

import jax
import jax.numpy as jnp
from jax.experimental import pallas as pl
from jax.experimental.pallas import tpu as pltpu

_LANE = 128


def _decode_kernel(x_ref, o_ref, *scratch, mode, t_total, t_chunk, num_t_chunks):
    """Fused temporal reduction + decode epilogue.

    x_ref : (Tc, TILE_S, 128) input tile for (feature-tile si, time-chunk ti)
    o_ref : (TILE_S, 128)     output tile, resident across the reduction axis
    scratch: optional (TILE_S, 128) f32 accumulator (multi-chunk, non-f32 input)
    """

    def epilogue(r):
        r = r.astype(jnp.float32)
        if mode in ("mean", "mean_sigmoid"):
            r = r * jnp.float32(1.0 / t_total)
        if mode in ("sum_sigmoid", "mean_sigmoid"):
            r = jax.nn.sigmoid(r)
        return r.astype(o_ref.dtype)

    if num_t_chunks == 1:
        # Whole time axis in one block: reduce, decode, single store.
        r = jnp.sum(x_ref[...].astype(jnp.float32), axis=0)
        o_ref[...] = epilogue(r)
        return

    acc_ref = scratch[0] if scratch else o_ref
    ti = pl.program_id(1)

    @pl.when(ti == 0)
    def _init():
        acc_ref[...] = jnp.zeros_like(acc_ref)

    xb = x_ref[...].astype(acc_ref.dtype)
    if t_total % t_chunk != 0:
        # Ragged last time-chunk: zero the out-of-range time rows so the
        # unspecified padded block contents never reach the accumulator.
        row = jax.lax.broadcasted_iota(jnp.int32, xb.shape, 0)
        valid = t_total - ti * t_chunk
        xb = jnp.where(row < valid, xb, jnp.zeros_like(xb))
    acc_ref[...] += jnp.sum(xb, axis=0)

    @pl.when(ti == num_t_chunks - 1)
    def _finalize():
        o_ref[...] = epilogue(acc_ref[...])


def _reduce_decode(x, mode):
    """x: (T, ...) -> reduce over axis 0 with optional mean/sigmoid, via Pallas."""
    t_total = x.shape[0]
    feat_shape = x.shape[1:]
    m = math.prod(feat_shape) if feat_shape else 1

    x2 = x.reshape(t_total, m)
    pad = (-m) % _LANE
    if pad:
        # TODO(synk): replace this HBM pad/slice round-trip with an in-kernel
        # masked store; only triggers when prod(feature dims) % 128 != 0.
        x2 = jnp.pad(x2, ((0, 0), (0, pad)))
    m_padded = m + pad
    s = m_padded // _LANE
    x3 = x2.reshape(t_total, s, _LANE)

    # ---- tile sizing: ~2 MB input DMAs, sublane-safe feature tiles -----------
    itemsize = jnp.dtype(x.dtype).itemsize
    t_chunk = min(t_total, 8)                       # fold up to 8 steps / block
    target_bytes = 2 << 20                          # ~2 MB per input block
    tile_s_cap = max(32, target_bytes // (t_chunk * _LANE * itemsize))
    if s <= tile_s_cap:
        tile_s = s                                  # full dim -> always legal
    else:
        tile_s = max(32, (tile_s_cap // 32) * 32)   # multiple of 32 (any dtype)

    num_s_tiles = pl.cdiv(s, tile_s)
    num_t_chunks = pl.cdiv(t_total, t_chunk)

    # Multi-chunk + non-f32 input: accumulate in an f32 VMEM scratch.  f32
    # inputs (or a single time chunk) accumulate straight into the resident
    # output block.
    use_scratch = (
        num_t_chunks > 1 and jnp.dtype(x.dtype) != jnp.dtype(jnp.float32)
    )
    scratch_shapes = (
        [pltpu.VMEM((tile_s, _LANE), jnp.float32)] if use_scratch else []
    )

    kernel = functools.partial(
        _decode_kernel,
        mode=mode,
        t_total=t_total,
        t_chunk=t_chunk,
        num_t_chunks=num_t_chunks,
    )

    out = pl.pallas_call(
        kernel,
        out_shape=jax.ShapeDtypeStruct((s, _LANE), x.dtype),
        grid_spec=pltpu.PrefetchScalarGridSpec(
            num_scalar_prefetch=0,
            grid=(num_s_tiles, num_t_chunks),
            in_specs=[
                pl.BlockSpec(
                    (t_chunk, tile_s, _LANE), lambda si, ti: (ti, si, 0)
                )
            ],
            out_specs=pl.BlockSpec((tile_s, _LANE), lambda si, ti: (si, 0)),
            scratch_shapes=scratch_shapes,
        ),
        compiler_params=pltpu.CompilerParams(
            # Feature tiles are independent (shard across v7x's 2 TCs); the
            # time-chunk axis is the reduction.
            dimension_semantics=("parallel", "arbitrary"),
        ),
    )(x3)

    out = out.reshape(m_padded)
    if pad:
        out = out[:m]
    return out.reshape(feat_shape)


def snn_decoder(x, method):
    """JAX/Pallas equivalent of SnnDecoder(method).forward(x)."""
    if method == "sum_sigmoid":
        return _reduce_decode(x, "sum_sigmoid")
    if method == "mean_sigmoid":
        return _reduce_decode(x, "mean_sigmoid")
    if method == "mean":
        return _reduce_decode(x, "mean")
    if method == "select_last":
        # Pure indexing, no compute hot path -> plain JAX glue.
        return x[-1]
    if method == "dvs":
        # Pure axis transpose (t,b,2,h,w) -> (b,t,2,h,w), no compute hot path.
        return jnp.swapaxes(x, 0, 1)
    raise ValueError(f"unknown method: {method}")


if __name__ == "__main__":
    key = jax.random.PRNGKey(0)
    T, B, C, H, W = 8, 2, 4, 16, 16
    x = jax.random.normal(key, (T, B, C, H, W), dtype=jnp.float32)

    # Pure-JAX references.
    refs = {
        "sum_sigmoid": jax.nn.sigmoid(jnp.sum(x, 0)),
        "mean_sigmoid": jax.nn.sigmoid(jnp.mean(x, 0)),
        "mean": jnp.mean(x, 0),
        "select_last": x[-1],
        "dvs": jnp.swapaxes(x, 0, 1),
    }
    for method, ref in refs.items():
        out = jax.block_until_ready(snn_decoder(x, method))
        assert out.shape == ref.shape, (method, out.shape, ref.shape)
        assert out.dtype == ref.dtype, (method, out.dtype, ref.dtype)
        assert jnp.allclose(out, ref, atol=1e-5, rtol=1e-5), method

    # bf16 input + ragged time (f32-scratch accumulation + time-mask paths).
    xb = jax.random.normal(key, (11, 2, 4, 16, 16), dtype=jnp.bfloat16)
    out_b = jax.block_until_ready(snn_decoder(xb, "mean_sigmoid"))
    ref_b = jax.nn.sigmoid(jnp.mean(xb.astype(jnp.float32), 0)).astype(jnp.bfloat16)
    assert out_b.shape == ref_b.shape and out_b.dtype == jnp.bfloat16
    assert jnp.allclose(
        out_b.astype(jnp.float32), ref_b.astype(jnp.float32), atol=1e-2, rtol=1e-2
    )

    # f32 input, ragged multi-chunk time (accumulate into resident output).
    xc = jax.random.normal(key, (20, 2, 4, 8, 8), dtype=jnp.float32)
    out_c = jax.block_until_ready(snn_decoder(xc, "mean"))
    assert jnp.allclose(out_c, jnp.mean(xc, 0), atol=1e-5, rtol=1e-5)

    # Feature size not a multiple of 128 (lane-pad path).
    xd = jax.random.normal(key, (5, 3, 3, 10, 10), dtype=jnp.float32)
    out_d = jax.block_until_ready(snn_decoder(xd, "sum_sigmoid"))
    assert jnp.allclose(out_d, jax.nn.sigmoid(jnp.sum(xd, 0)), atol=1e-5, rtol=1e-5)

    print("KERNEL_OK")
</pallas_src>

<mosaic_0001>
module attributes {stable_mosaic.version = 11 : i64} {
  func.func @_decode_kernel(%arg0: i32, %arg1: i32, %arg2: memref<8x16x128xf32, #tpu.memory_space<vmem>>, %arg3: memref<16x128xf32, #tpu.memory_space<vmem>>) attributes {dimension_semantics = [#tpu.dimension_semantics<parallel>, #tpu.dimension_semantics<arbitrary>], iteration_bounds = array<i64: 1, 1>, scalar_prefetch = 0 : i64, scratch_operands = 0 : i64, tpu.core_type = #tpu.core_type<tc>, window_params = [{transform_indices = @transform_0, window_bounds = array<i64: 8, 16, 128>}, {transform_indices = @transform_1, window_bounds = array<i64: 16, 128>}]} {
    %c0 = arith.constant 0 : index
    %c0_0 = arith.constant 0 : index
    %c0_1 = arith.constant 0 : index
    %0 = vector.load %arg2[%c0, %c0_0, %c0_1] : memref<8x16x128xf32, #tpu.memory_space<vmem>>, vector<8x16x128xf32>
    %cst = arith.constant dense<0.000000e+00> : vector<16x128xf32>
    %1 = vector.multi_reduction <add>, %0, %cst [0] : vector<8x16x128xf32> to vector<16x128xf32>
    %2 = arith.negf %1 : vector<16x128xf32>
    %3 = math.exp %2 : vector<16x128xf32>
    %cst_2 = arith.constant 1.000000e+00 : f32
    %4 = vector.broadcast %cst_2 : f32 to vector<16x128xf32>
    %5 = arith.addf %4, %3 : vector<16x128xf32>
    %6 = arith.divf %4, %5 : vector<16x128xf32>
    %c0_3 = arith.constant 0 : index
    %c0_4 = arith.constant 0 : index
    %7 = vector.load %arg3[%c0_3, %c0_4] : memref<16x128xf32, #tpu.memory_space<vmem>>, vector<16x128xf32>
    tpu.vector_store %arg3[%c0_3, %c0_4], %6 {strides = array<i32>} : memref<16x128xf32, #tpu.memory_space<vmem>>, vector<16x128xf32>,
    return
  }
  func.func @transform_0(%arg0: i32, %arg1: i32) -> (i32, i32, i32) {
    %c0_i32 = arith.constant 0 : i32
    %c0_i32_0 = arith.constant 0 : i32
    return %arg1, %arg0, %c0_i32 : i32, i32, i32
  }
  func.func @transform_1(%arg0: i32, %arg1: i32) -> (i32, i32) {
    %c0_i32 = arith.constant 0 : i32
    %c0_i32_0 = arith.constant 0 : i32
    return %arg0, %c0_i32 : i32, i32
  }
}

</mosaic_0001>

<llo_original>
// kernel: tpu_custom_call.1
$region0: #{tpu_custom_call.1}
  #allocation0 [shape = 'u32[]', space=smem, size = 0x4, offset = 0x4, fixed_abs, tag = 'smem constant byte address 0x4 - core index']
  #allocation1 [shape = 'u32[144,128]{1,0:T(1,128)}', space=vmem, size = 0x12000, scoped, tag = 'internal scratch']
  %s0 = inlined_call_operand.hbm [shape: f32[8,16,128], index: 0, kind: input, shape index: {}]
  %s1 = inlined_call_operand.hbm [shape: f32[16,128], index: 1, kind: output, shape index: {}]
  %s2 = sld [smem:[#allocation0]]
  $region18: #{tpu_custom_call.1} parent=0
    _
  %s4 = ssub.s32 1, %s2
  %s5 = scalar_select 0, %s4, %s2
  $region1: #{tpu_custom_call.1} parent=0
    #allocation2 [shape = 'u8[65536]{0}', space=vmem, size = 0x10000, scoped, tag = 'input window, operand 0, single buffered']
    #allocation3 [shape = 's32[1]{0}', space=sflag, size = 0x4, scoped, tag = 'scoped memory for tpu_custom_call.1']
    #allocation4 [shape = 's32[1]{0}', space=sflag, size = 0x4, scoped, tag = 'scoped memory for tpu_custom_call.1']
    #allocation5 [shape = 'u8[8192]{0}', space=vmem, size = 0x2000, scoped, tag = 'output window, operand 0, single buffered']
    %6 = vsyncpa [#allocation3], 0
    %7 = vsyncpa [#allocation4], 0
    // Predicated region
    $region2: #{tpu_custom_call.1} parent=1 // pred_check
      _
    $region3: #{tpu_custom_call.1} parent=1 // pred_check_branch
      %9 = sbr.rel (0) target = $region5
    $region4: #{tpu_custom_call.1} parent=1 // pred_region
      %s11 = ssub.s32 2048, 2048
      %12 = vsyncadd [#allocation3], %s11
      %s13 = sshll.u32 [#allocation2], 4
      %s14 = int_to_ptr.vmem [resolvable:$true] %s13
      %19 = dma.hbm_to_vmem [thread:$0]  %s0, 2048, %s14, [#allocation3], 128, 128, 8
    $region5: #{tpu_custom_call.1} parent=1 // pred_fallthru
      _
    // Predicated region
    $region6: #{tpu_custom_call.1} parent=1 // pred_check
      _
    $region7: #{tpu_custom_call.1} parent=1 // pred_check_branch
      %21 = sbr.rel (0) target = $region9
    $region8: #{tpu_custom_call.1} parent=1 // pred_region
      %22 = dma.done [#allocation3], 2048
    $region9: #{tpu_custom_call.1} parent=1 // pred_fallthru
      _
    %v23 = vld [vmem:[#allocation2] sm:$0xff]
    %v24 = vld [vmem:[#allocation2 + $0x8] sm:$0xff]
    %v25 = vld [vmem:[#allocation2 + $0x10] sm:$0xff]
    %v26 = vld [vmem:[#allocation2 + $0x18] sm:$0xff]
    %v27 = vld [vmem:[#allocation2 + $0x20] sm:$0xff]
    %v28 = vld [vmem:[#allocation2 + $0x28] sm:$0xff]
    %v29 = vld [vmem:[#allocation2 + $0x30] sm:$0xff]
    %v30 = vld [vmem:[#allocation2 + $0x38] sm:$0xff]
    %v31 = vld [vmem:[#allocation2 + $0x40] sm:$0xff]
    %v32 = vld [vmem:[#allocation2 + $0x48] sm:$0xff]
    %v33 = vld [vmem:[#allocation2 + $0x50] sm:$0xff]
    %v34 = vld [vmem:[#allocation2 + $0x58] sm:$0xff]
    %v35 = vld [vmem:[#allocation2 + $0x60] sm:$0xff]
    %v36 = vld [vmem:[#allocation2 + $0x68] sm:$0xff]
    %v37 = vld [vmem:[#allocation2 + $0x70] sm:$0xff]
    %v38 = vld [vmem:[#allocation2 + $0x78] sm:$0xff]
    %v39 = vadd.f32 %v23, %v25
    %v40 = vadd.f32 %v39, %v27
    %v41 = vadd.f32 %v40, %v29
    %v42 = vadd.f32 %v41, %v31
    %v43 = vadd.f32 %v42, %v33
    %v44 = vadd.f32 %v43, %v35
    %v45 = vadd.f32 %v44, %v37
    %v46 = vadd.f32 %v24, %v26
    %v47 = vadd.f32 %v46, %v28
    %v48 = vadd.f32 %v47, %v30
    %v49 = vadd.f32 %v48, %v32
    %v50 = vadd.f32 %v49, %v34
    %v51 = vadd.f32 %v50, %v36
    %v52 = vadd.f32 %v51, %v38
    %v53 = vxor.u32 %v45, 2147483648
    %v54 = vxor.u32 %v52, 2147483648
    %v55 = vmul.f32 %v53, 1.442695
    %v56 = vpow.pop %v55
    %v57 = vmul.f32 %v54, 1.442695
    %v58 = vpow.pop %v57
    %v59 = vadd.f32 %v56, 1.0
    %v60 = vadd.f32 %v58, 1.0
    %v61 = vrcp.pop %v59
    %v62 = vmul.f32 1.0, %v61
    %v63 = vrcp.pop %v60
    %v64 = vmul.f32 1.0, %v63
    %65 = vst [vmem:[#allocation5] sm:$0xff] %v62
    %66 = vst [vmem:[#allocation5 + $0x8] sm:$0xff] %v64
    // Predicated region
    $region10: #{tpu_custom_call.1} parent=1 // pred_check
      _
    $region11: #{tpu_custom_call.1} parent=1 // pred_check_branch
      %68 = sbr.rel (0) target = $region13
    $region12: #{tpu_custom_call.1} parent=1 // pred_region
      %s70 = ssub.s32 256, 256
      %71 = vsyncadd [#allocation4], %s70
      %s72 = sshll.u32 [#allocation5], 4
      %s73 = int_to_ptr.vmem [resolvable:$true] %s72
      %78 = dma.vmem_to_hbm [thread:$0]  %s73, 256, %s1, [#allocation4], 128, 128, 8
    $region13: #{tpu_custom_call.1} parent=1 // pred_fallthru
      _
    // Predicated region
    $region14: #{tpu_custom_call.1} parent=1 // pred_check
      _
    $region15: #{tpu_custom_call.1} parent=1 // pred_check_branch
      %80 = sbr.rel (0) target = $region17
    $region16: #{tpu_custom_call.1} parent=1 // pred_region
      %81 = dma.done [#allocation4], 256
    $region17: #{tpu_custom_call.1} parent=1 // pred_fallthru
      _
    %82 = vsyncpa [#allocation3], 1
    %83 = vsyncpa [#allocation4], 1

</llo_original>
